<compile_context>
chip_gen: v7x
topology: tpu7x:2x2x1
jax: 0.10.0
libtpu: 0.0.40
codegen_flags: <defaults>
</compile_context>

<pallas_src>
import jax
import jax.numpy as jnp
from jax.experimental import pallas as pl
from jax.experimental.pallas import tpu as pltpu


def _round_up(x, m):
    return ((x + m - 1) // m) * m


def _logreg_kernel(x_ref, wt_ref, b_ref, o_ref, acc_ref):
    # x_ref : (block_m, block_k) bf16   input tile
    # wt_ref: (block_k, block_n) bf16   W^T tile
    # b_ref : (1, block_n)       f32    bias row tile
    # o_ref : (block_m, block_n) f32    output tile
    # acc_ref:(block_m, block_n) f32    accumulator scratch (resident across K)
    k = pl.program_id(2)

    @pl.when(k == 0)
    def _():
        acc_ref[...] = jnp.zeros_like(acc_ref)

    acc_ref[...] += jnp.dot(
        x_ref[...], wt_ref[...], preferred_element_type=jnp.float32
    )

    @pl.when(k == pl.num_programs(2) - 1)
    def _():
        z = acc_ref[...] + b_ref[...]                 # f32 epilogue
        o_ref[...] = jax.nn.sigmoid(z).astype(o_ref.dtype)


def logistic_regression_forward(x, weight, bias, *,
                                block_m=512, block_n=512, block_k=512):
    """y = sigmoid(x @ weight.T + bias), computed in a Pallas TPU kernel.

    x:      (B, D_in)     float32
    weight: (D_out, D_in) float32  (torch nn.Linear layout)
    bias:   (D_out,)      float32
    """
    B, d_in = x.shape
    d_out = weight.shape[0]

    # ---- lane/sublane aligned, padded problem sizes ------------------------
    d_in_p = _round_up(d_in, 128)
    d_out_p = _round_up(d_out, 128)

    block_m = max(8, _round_up(min(block_m, _round_up(B, 8)), 8))
    block_n = min(_round_up(block_n, 128), d_out_p)
    block_k = min(_round_up(block_k, 128), d_in_p)

    B_p = _round_up(B, block_m)           # ragged batch -> zero-padded rows

    # ---- operand prep (glue, plain JAX): pad + transpose + bf16 ------------
    x_p = jnp.zeros((B_p, d_in_p), jnp.bfloat16).at[:B, :d_in].set(
        x.astype(jnp.bfloat16))
    wt_p = jnp.zeros((d_in_p, d_out_p), jnp.bfloat16).at[:d_in, :d_out].set(
        weight.T.astype(jnp.bfloat16))
    b_p = jnp.zeros((1, d_out_p), jnp.float32).at[0, :d_out].set(
        bias.astype(jnp.float32))

    grid = (B_p // block_m, d_out_p // block_n, d_in_p // block_k)

    # Per-step double-buffered VMEM footprint (+ accumulator) with headroom;
    # keep well under v7x's 64 MiB physical VMEM.
    step_bytes = (2 * (block_m * block_k * 2          # x tile (bf16)
                       + block_k * block_n * 2        # W^T tile (bf16)
                       + block_n * 4                  # bias tile (f32)
                       + block_m * block_n * 4)       # output tile (f32)
                  + block_m * block_n * 4)            # accumulator scratch
    vmem_limit = int(min(max(2 * step_bytes, 32 << 20), 60 << 20))

    cost = pl.CostEstimate(
        flops=2 * B * d_in * d_out,
        transcendentals=B * d_out,
        bytes_accessed=(2 * B_p * d_in_p          # x (bf16)
                        + 2 * d_in_p * d_out_p    # W^T (bf16)
                        + 4 * d_out_p             # bias (f32)
                        + 4 * B_p * d_out_p),     # output (f32)
    )

    out_p = pl.pallas_call(
        _logreg_kernel,
        out_shape=jax.ShapeDtypeStruct((B_p, d_out_p), jnp.float32),
        grid_spec=pltpu.PrefetchScalarGridSpec(
            num_scalar_prefetch=0,
            grid=grid,
            in_specs=[
                pl.BlockSpec((block_m, block_k), lambda i, j, k: (i, k)),  # x
                pl.BlockSpec((block_k, block_n), lambda i, j, k: (k, j)),  # W^T
                pl.BlockSpec((1, block_n), lambda i, j, k: (0, j)),        # bias
            ],
            out_specs=pl.BlockSpec((block_m, block_n), lambda i, j, k: (i, j)),
            scratch_shapes=[pltpu.VMEM((block_m, block_n), jnp.float32)],
        ),
        compiler_params=pltpu.CompilerParams(
            dimension_semantics=("parallel", "parallel", "arbitrary"),
            vmem_limit_bytes=vmem_limit,
        ),
        cost_estimate=cost,
    )(x_p, wt_p, b_p)

    # Slice off batch / output-column padding; return in the input dtype.
    return out_p[:B, :d_out].astype(x.dtype)


if __name__ == "__main__":
    # Small, deterministic synthetic setup (no checkpoint loading).
    batch = 8
    input_dim = 32
    output_dim = 16

    key = jax.random.PRNGKey(0)
    kx, kw, kb = jax.random.split(key, 3)

    x = jax.random.normal(kx, (batch, input_dim), dtype=jnp.float32)

    # Deterministic init mimicking nn.Linear's uniform(-1/sqrt(fan_in), 1/sqrt(fan_in)).
    bound = 1.0 / jnp.sqrt(jnp.float32(input_dim))
    weight = jax.random.uniform(
        kw, (output_dim, input_dim), dtype=jnp.float32, minval=-bound, maxval=bound
    )
    bias = jax.random.uniform(
        kb, (output_dim,), dtype=jnp.float32, minval=-bound, maxval=bound
    )

    y = logistic_regression_forward(x, weight, bias)
    y = jax.block_until_ready(y)
    assert y.shape == (batch, output_dim)

    # Reference with bf16-cast operands (kernel matmul runs in bf16 on the MXU
    # with f32 accumulation) -- should match tightly.
    xb = x.astype(jnp.bfloat16).astype(jnp.float32)
    wb = weight.astype(jnp.bfloat16).astype(jnp.float32)
    y_ref_bf16 = jax.nn.sigmoid(xb @ wb.T + bias)
    assert jnp.allclose(y, y_ref_bf16, atol=1e-4, rtol=1e-4)

    # Full-precision reference -- loose tolerance accounts for bf16 operands.
    y_ref_f32 = jax.nn.sigmoid(x @ weight.T + bias)
    assert jnp.allclose(y, y_ref_f32, atol=2e-2, rtol=2e-2)

    print("KERNEL_OK")
</pallas_src>

<mosaic_0001>
module attributes {stable_mosaic.version = 11 : i64} {
  func.func @_logreg_kernel(%arg0: i32, %arg1: i32, %arg2: i32, %arg3: memref<8x128xbf16, #tpu.memory_space<vmem>>, %arg4: memref<128x128xbf16, #tpu.memory_space<vmem>>, %arg5: memref<1x128xf32, #tpu.memory_space<vmem>>, %arg6: memref<8x128xf32, #tpu.memory_space<vmem>>, %arg7: memref<8x128xf32, #tpu.memory_space<vmem>>) attributes {dimension_semantics = [#tpu.dimension_semantics<parallel>, #tpu.dimension_semantics<parallel>, #tpu.dimension_semantics<arbitrary>], iteration_bounds = array<i64: 1, 1, 1>, scalar_prefetch = 0 : i64, scratch_operands = 1 : i64, tpu.core_type = #tpu.core_type<tc>, window_params = [{transform_indices = @transform_0, window_bounds = array<i64: 8, 128>}, {transform_indices = @transform_1, window_bounds = array<i64: 128, 128>}, {transform_indices = @transform_2, window_bounds = array<i64: 1, 128>}, {transform_indices = @transform_3, window_bounds = array<i64: 8, 128>}]} {
    %c0_i32 = arith.constant 0 : i32
    %0 = arith.cmpi eq, %arg2, %c0_i32 : i32
    %1 = arith.extui %0 : i1 to i32
    %c0_i32_0 = arith.constant 0 : i32
    %2 = arith.cmpi ne, %1, %c0_i32_0 : i32
    scf.if %2 {
      %cst_10 = arith.constant 0.000000e+00 : f32
      %12 = vector.broadcast %cst_10 : f32 to vector<8x128xf32>
      %c0_11 = arith.constant 0 : index
      %c0_12 = arith.constant 0 : index
      %13 = vector.load %arg7[%c0_11, %c0_12] : memref<8x128xf32, #tpu.memory_space<vmem>>, vector<8x128xf32>
      tpu.vector_store %arg7[%c0_11, %c0_12], %12 {strides = array<i32>} : memref<8x128xf32, #tpu.memory_space<vmem>>, vector<8x128xf32>,
    } else {
    }
    %c0 = arith.constant 0 : index
    %c0_1 = arith.constant 0 : index
    %3 = vector.load %arg7[%c0, %c0_1] : memref<8x128xf32, #tpu.memory_space<vmem>>, vector<8x128xf32>
    %c0_2 = arith.constant 0 : index
    %c0_3 = arith.constant 0 : index
    %4 = vector.load %arg3[%c0_2, %c0_3] : memref<8x128xbf16, #tpu.memory_space<vmem>>, vector<8x128xbf16>
    %c0_4 = arith.constant 0 : index
    %c0_5 = arith.constant 0 : index
    %5 = vector.load %arg4[%c0_4, %c0_5] : memref<128x128xbf16, #tpu.memory_space<vmem>>, vector<128x128xbf16>
    %cst = arith.constant dense<0.000000e+00> : vector<8x128xf32>
    %6 = tpu.matmul %4, %5, %cst {dimension_numbers = #tpu.dot_dimension_numbers<[1], [0], [0], [1], [0, 0, 1, 1], [], []>} : vector<8x128xbf16>, vector<128x128xbf16>, vector<8x128xf32> -> vector<8x128xf32>
    %7 = arith.addf %3, %6 : vector<8x128xf32>
    %c0_6 = arith.constant 0 : index
    %c0_7 = arith.constant 0 : index
    %8 = vector.load %arg7[%c0_6, %c0_7] : memref<8x128xf32, #tpu.memory_space<vmem>>, vector<8x128xf32>
    tpu.vector_store %arg7[%c0_6, %c0_7], %7 {strides = array<i32>} : memref<8x128xf32, #tpu.memory_space<vmem>>, vector<8x128xf32>,
    %c0_i32_8 = arith.constant 0 : i32
    %9 = arith.cmpi eq, %arg2, %c0_i32_8 : i32
    %10 = arith.extui %9 : i1 to i32
    %c0_i32_9 = arith.constant 0 : i32
    %11 = arith.cmpi ne, %10, %c0_i32_9 : i32
    scf.if %11 {
      %c0_10 = arith.constant 0 : index
      %c0_11 = arith.constant 0 : index
      %12 = vector.load %arg7[%c0_10, %c0_11] : memref<8x128xf32, #tpu.memory_space<vmem>>, vector<8x128xf32>
      %c0_12 = arith.constant 0 : index
      %c0_13 = arith.constant 0 : index
      %13 = vector.load %arg5[%c0_12, %c0_13] : memref<1x128xf32, #tpu.memory_space<vmem>>, vector<1x128xf32>
      %14 = vector.broadcast %13 : vector<1x128xf32> to vector<8x128xf32>
      %15 = arith.addf %12, %14 : vector<8x128xf32>
      %16 = arith.negf %15 : vector<8x128xf32>
      %17 = math.exp %16 : vector<8x128xf32>
      %cst_14 = arith.constant 1.000000e+00 : f32
      %18 = vector.broadcast %cst_14 : f32 to vector<8x128xf32>
      %19 = arith.addf %18, %17 : vector<8x128xf32>
      %20 = arith.divf %18, %19 : vector<8x128xf32>
      %c0_15 = arith.constant 0 : index
      %c0_16 = arith.constant 0 : index
      %21 = vector.load %arg6[%c0_15, %c0_16] : memref<8x128xf32, #tpu.memory_space<vmem>>, vector<8x128xf32>
      tpu.vector_store %arg6[%c0_15, %c0_16], %20 {strides = array<i32>} : memref<8x128xf32, #tpu.memory_space<vmem>>, vector<8x128xf32>,
    } else {
    }
    return
  }
  func.func @transform_0(%arg0: i32, %arg1: i32, %arg2: i32) -> (i32, i32) {
    %c0_i32 = arith.constant 0 : i32
    return %arg0, %arg2 : i32, i32
  }
  func.func @transform_1(%arg0: i32, %arg1: i32, %arg2: i32) -> (i32, i32) {
    %c0_i32 = arith.constant 0 : i32
    return %arg2, %arg1 : i32, i32
  }
  func.func @transform_2(%arg0: i32, %arg1: i32, %arg2: i32) -> (i32, i32) {
    %c0_i32 = arith.constant 0 : i32
    %c0_i32_0 = arith.constant 0 : i32
    return %c0_i32, %arg1 : i32, i32
  }
  func.func @transform_3(%arg0: i32, %arg1: i32, %arg2: i32) -> (i32, i32) {
    %c0_i32 = arith.constant 0 : i32
    return %arg0, %arg1 : i32, i32
  }
}

</mosaic_0001>

<llo_original>
// kernel: tpu_custom_call.1
$region0: #{tpu_custom_call.1}
  #allocation0 [shape = 'u32[]', space=smem, size = 0x4, offset = 0x4, fixed_abs, tag = 'smem constant byte address 0x4 - core index']
  #allocation1 [shape = 'u32[144,128]{1,0:T(1,128)}', space=vmem, size = 0x12000, scoped, tag = 'internal scratch']
  #allocation2 [shape = 'f32[8,128]{1,0:T(8,128)}', space=vmem, size = 0x1000, scoped, tag = 'scratch operand']
  %s0 = inlined_call_operand.hbm [shape: bf16[8,128], index: 0, kind: input, shape index: {}]
  %s1 = inlined_call_operand.hbm [shape: bf16[128,128], index: 1, kind: input, shape index: {}]
  %s2 = inlined_call_operand.vmem [shape: f32[1,128], index: 2, kind: input, shape index: {}]
  %s3 = inlined_call_operand.hbm [shape: f32[8,128], index: 3, kind: output, shape index: {}]
  %s4 = sld [smem:[#allocation0]]
  $region38: #{tpu_custom_call.1} parent=0
    _
  %s6 = ssub.s32 1, %s4
  %s7 = scalar_select 0, %s6, %s4
  $region1: #{tpu_custom_call.1} parent=0
    #allocation3 [shape = 'u8[2048]{0}', space=vmem, size = 0x800, scoped, tag = 'input window, operand 0, single buffered']
    #allocation4 [shape = 's32[1]{0}', space=sflag, size = 0x4, scoped, tag = 'scoped memory for tpu_custom_call.1']
    #allocation5 [shape = 's32[1]{0}', space=sflag, size = 0x4, scoped, tag = 'scoped memory for tpu_custom_call.1']
    #allocation6 [shape = 'u8[32768]{0}', space=vmem, size = 0x8000, scoped, tag = 'input window, operand 1, single buffered']
    #allocation7 [shape = 's32[1]{0}', space=sflag, size = 0x4, scoped, tag = 'scoped memory for tpu_custom_call.1']
    #allocation8 [shape = 'u8[4096]{0}', space=vmem, size = 0x1000, scoped, tag = 'output window, operand 0, single buffered']
    %8 = vsyncpa [#allocation4], 0
    %9 = vsyncpa [#allocation7], 0
    %10 = vsyncpa [#allocation5], 0
    // Predicated region
    $region2: #{tpu_custom_call.1} parent=1 // pred_check
      _
    $region3: #{tpu_custom_call.1} parent=1 // pred_check_branch
      %12 = sbr.rel (0) target = $region5
    $region4: #{tpu_custom_call.1} parent=1 // pred_region
      %s14 = ssub.s32 64, 64
      %15 = vsyncadd [#allocation4], %s14
      %s17 = sshll.u32 [#allocation3], 4
      %s18 = int_to_ptr.vmem [resolvable:$true] %s17
      %20 = dma.hbm_to_vmem [thread:$0]  %s0, 64, %s18, [#allocation4]
    $region5: #{tpu_custom_call.1} parent=1 // pred_fallthru
      _
    // Predicated region
    $region6: #{tpu_custom_call.1} parent=1 // pred_check
      _
    $region7: #{tpu_custom_call.1} parent=1 // pred_check_branch
      %22 = sbr.rel (0) target = $region9
    $region8: #{tpu_custom_call.1} parent=1 // pred_region
      %s24 = ssub.s32 1024, 1024
      %25 = vsyncadd [#allocation7], %s24
      %s26 = sshll.u32 [#allocation6], 4
      %s27 = int_to_ptr.vmem [resolvable:$true] %s26
      %32 = dma.hbm_to_vmem [thread:$0]  %s1, 1024, %s27, [#allocation7], 64, 64, 4
    $region9: #{tpu_custom_call.1} parent=1 // pred_fallthru
      _
    // Predicated region
    $region10: #{tpu_custom_call.1} parent=1 // pred_check
      _
    $region11: #{tpu_custom_call.1} parent=1 // pred_check_branch
      %34 = sbr.rel (0) target = $region13
    $region12: #{tpu_custom_call.1} parent=1 // pred_region
      _
    $region13: #{tpu_custom_call.1} parent=1 // pred_fallthru
      _
    // Predicated region
    $region14: #{tpu_custom_call.1} parent=1 // pred_check
      _
    $region15: #{tpu_custom_call.1} parent=1 // pred_check_branch
      %36 = sbr.rel (0) target = $region17
    $region16: #{tpu_custom_call.1} parent=1 // pred_region
      %37 = dma.done [#allocation4], 64
    $region17: #{tpu_custom_call.1} parent=1 // pred_fallthru
      _
    // Predicated region
    $region18: #{tpu_custom_call.1} parent=1 // pred_check
      _
    $region19: #{tpu_custom_call.1} parent=1 // pred_check_branch
      %39 = sbr.rel (0) target = $region21
    $region20: #{tpu_custom_call.1} parent=1 // pred_region
      %40 = dma.done [#allocation7], 1024
    $region21: #{tpu_custom_call.1} parent=1 // pred_fallthru
      _
    %p42 = scmp.eq.s32.totalorder 0, 0
    // Predicated region
    $region22: #{tpu_custom_call.1} parent=1 // pred_check
      %p43 = pneg %p42
    $region23: #{tpu_custom_call.1} parent=1 // pred_check_branch
      %45 = sbr.rel (%p43) target = $region25
    $region24: #{tpu_custom_call.1} parent=1 // pred_region
      %46 = vst [vmem:[#allocation2] sm:$0xff] 0.0
    $region25: #{tpu_custom_call.1} parent=1 // pred_fallthru
      _
    %v47 = vld [vmem:[#allocation2] sm:$0xff]
    %v48 = vld [vmem:[#allocation3] sm:$0xf]
    %v49 = vld [vmem:[#allocation6] sm:$0xf]
    %v50 = vld [vmem:[#allocation6 + $0x4] sm:$0xf]
    %v51 = vld [vmem:[#allocation6 + $0x8] sm:$0xf]
    %v52 = vld [vmem:[#allocation6 + $0xc] sm:$0xf]
    %v53 = vld [vmem:[#allocation6 + $0x10] sm:$0xf]
    %v54 = vld [vmem:[#allocation6 + $0x14] sm:$0xf]
    %v55 = vld [vmem:[#allocation6 + $0x18] sm:$0xf]
    %v56 = vld [vmem:[#allocation6 + $0x1c] sm:$0xf]
    %v57 = vld [vmem:[#allocation6 + $0x20] sm:$0xf]
    %v58 = vld [vmem:[#allocation6 + $0x24] sm:$0xf]
    %v59 = vld [vmem:[#allocation6 + $0x28] sm:$0xf]
    %v60 = vld [vmem:[#allocation6 + $0x2c] sm:$0xf]
    %v61 = vld [vmem:[#allocation6 + $0x30] sm:$0xf]
    %v62 = vld [vmem:[#allocation6 + $0x34] sm:$0xf]
    %v63 = vld [vmem:[#allocation6 + $0x38] sm:$0xf]
    %v64 = vld [vmem:[#allocation6 + $0x3c] sm:$0xf]
    %v81 = vunpack.c.l.b16 %v49
    %v82 = vunpack.c.l.b16 %v50
    %v83 = vunpack.c.l.b16 %v51
    %v84 = vunpack.c.l.b16 %v52
    %v85 = vunpack.c.l.b16 %v53
    %v86 = vunpack.c.l.b16 %v54
    %v87 = vunpack.c.l.b16 %v55
    %v88 = vunpack.c.l.b16 %v56
    %v89 = vunpack.c.l.b16 %v57
    %v90 = vunpack.c.l.b16 %v58
    %v91 = vunpack.c.l.b16 %v59
    %v92 = vunpack.c.l.b16 %v60
    %v93 = vunpack.c.l.b16 %v61
    %v94 = vunpack.c.l.b16 %v62
    %v95 = vunpack.c.l.b16 %v63
    %v96 = vunpack.c.l.b16 %v64
    %v97 = vpack.c.b16 %v82, %v81
    %v98 = vpack.c.b16 %v84, %v83
    %v99 = vpack.c.b16 %v86, %v85
    %v100 = vpack.c.b16 %v88, %v87
    %v101 = vpack.c.b16 %v90, %v89
    %v102 = vpack.c.b16 %v92, %v91
    %v103 = vpack.c.b16 %v94, %v93
    %v104 = vpack.c.b16 %v96, %v95
    %113 = vmatprep.subr.bf16.mxu0 0
    %114 = vmatpush1.bf16.msra.mxu0 %v97
    %115 = vmatprep.subr.bf16.mxu0 0
    %116 = vmatpush1.bf16.msra.mxu0 %v98
    %117 = vmatprep.subr.bf16.mxu0 0
    %118 = vmatpush1.bf16.msra.mxu0 %v99
    %119 = vmatprep.subr.bf16.mxu0 0
    %120 = vmatpush1.bf16.msra.mxu0 %v100
    %121 = vmatprep.subr.bf16.mxu0 0
    %122 = vmatpush1.bf16.msra.mxu0 %v101
    %123 = vmatprep.subr.bf16.mxu0 0
    %124 = vmatpush1.bf16.msra.mxu0 %v102
    %125 = vmatprep.subr.bf16.mxu0 0
    %126 = vmatpush1.bf16.msra.mxu0 %v103
    %127 = vmatprep.subr.bf16.mxu0 0
    %128 = vmatpush1.bf16.msra.mxu0 %v104
    %129 = vmatprep.subr.bf16.mxu0 0
    %130 = vmatpush1.bf16.msra.mxu0 0
    %131 = vmatprep.subr.bf16.mxu0 0
    %132 = vmatpush1.bf16.msra.mxu0 0
    %133 = vmatprep.subr.bf16.mxu0 0
    %134 = vmatpush1.bf16.msra.mxu0 0
    %135 = vmatprep.subr.bf16.mxu0 0
    %136 = vmatpush1.bf16.msra.mxu0 0
    %137 = vmatprep.subr.bf16.mxu0 0
    %138 = vmatpush1.bf16.msra.mxu0 0
    %139 = vmatprep.subr.bf16.mxu0 0
    %140 = vmatpush1.bf16.msra.mxu0 0
    %141 = vmatprep.subr.bf16.mxu0 0
    %142 = vmatpush1.bf16.msra.mxu0 0
    %143 = vmatprep.subr.bf16.mxu0 0
    %144 = vmatpush1.bf16.msra.mxu0 0
    %145 = vmatprep.mubr.bf16.mxu0 0
    %146 = vmatmul.mubr.bf16.gmra.mrb[0].mxu0 %v48
    %v147 = vpop.f32.mrb[0].mxu0
    %v148 = vadd.f32 0.0, %v147
    %v149 = vpop.f32.mrb[0].mxu0
    %v150 = vpop.f32.mrb[0].mxu0
    %v151 = vpop.f32.mrb[0].mxu0
    %152 = vdwg.mxu0
    %v153 = vadd.f32 %v47, %v148
    %154 = vst [vmem:[#allocation2] sm:$0xff] %v153
    // Predicated region
    $region26: #{tpu_custom_call.1} parent=1 // pred_check
      %p155 = pneg %p42
    $region27: #{tpu_custom_call.1} parent=1 // pred_check_branch
      %157 = sbr.rel (%p155) target = $region29
    $region28: #{tpu_custom_call.1} parent=1 // pred_region
      %v158 = vld [vmem:[#allocation2] sm:$0xff]
      %v159 = vld [vmem:[%s2] sm:$0x1]
      %v161 = vlaneseq
      %v162 = vshrl.u32 %v161, 7
      %v163 = vsub.s32 0, %v162
      %v164 = vrot.slane %v159, %v163
      %v166 = vadd.f32 %v158, %v164
      %v167 = vxor.u32 %v166, 2147483648
      %v168 = vmul.f32 %v167, 1.442695
      %v169 = vpow.pop %v168
      %v170 = vadd.f32 %v169, 1.0
      %v171 = vrcp.pop %v170
      %v172 = vmul.f32 1.0, %v171
      %173 = vst [vmem:[#allocation8] sm:$0xff] %v172
    $region29: #{tpu_custom_call.1} parent=1 // pred_fallthru
      _
    // Predicated region
    $region30: #{tpu_custom_call.1} parent=1 // pred_check
      _
    $region31: #{tpu_custom_call.1} parent=1 // pred_check_branch
      %175 = sbr.rel (0) target = $region33
    $region32: #{tpu_custom_call.1} parent=1 // pred_region
      %s177 = ssub.s32 128, 128
      %178 = vsyncadd [#allocation5], %s177
      %s180 = sshll.u32 [#allocation8], 4
      %s181 = int_to_ptr.vmem [resolvable:$true] %s180
      %183 = dma.vmem_to_hbm [thread:$0]  %s181, 128, %s3, [#allocation5]
    $region33: #{tpu_custom_call.1} parent=1 // pred_fallthru
      _
    // Predicated region
    $region34: #{tpu_custom_call.1} parent=1 // pred_check
      _
    $region35: #{tpu_custom_call.1} parent=1 // pred_check_branch
      %185 = sbr.rel (0) target = $region37
    $region36: #{tpu_custom_call.1} parent=1 // pred_region
      %186 = dma.done [#allocation5], 128
    $region37: #{tpu_custom_call.1} parent=1 // pred_fallthru
      _
    %187 = vsyncpa [#allocation4], 1
    %188 = vsyncpa [#allocation7], 1
    %189 = vsyncpa [#allocation5], 1

</llo_original>
